<compile_context>
chip_gen: v5e
topology: v5e:2x2
jax: 0.10.0
libtpu: 0.0.40
codegen_flags: <defaults>
</compile_context>

<pallas_src>
import jax
import jax.numpy as jnp
from jax.experimental import pallas as pl
from jax.experimental.pallas import tpu as pltpu

STUDENT_TEMP = 0.1
CENTER_MOMENTUM = 0.9


def _centering_loss_kernel(inv_temp_ref, l_ref, u_ref, c_ref, loss_ref, bsum_ref):
    """One batch tile, full feature dim resident.

    inv_temp_ref : SMEM (1,) f32       1 / teacher_temp for this epoch
    l_ref        : VMEM (TILE_B, D)    labelled (student) logits, native dtype
    u_ref        : VMEM (TILE_B, D)    unlabelled (teacher) logits, native dtype
    c_ref        : VMEM (1, D)         current center buffer
    loss_ref     : VMEM (TILE_B, 1)    per-row cross-entropy loss (out)
    bsum_ref     : VMEM (1, D)         this tile's column sum of u (out)
    """
    inv_teacher_temp = inv_temp_ref[0]

    # Widen to f32 per tile (inputs may be bf16 in HBM; f32 math on all gens).
    u = u_ref[...].astype(jnp.float32)
    l = l_ref[...].astype(jnp.float32)
    c = c_ref[...].astype(jnp.float32)

    # --- teacher branch: unnormalized softmax numerator + denominator -------
    t_logits = (u - c) * inv_teacher_temp
    t_max = jnp.max(t_logits, axis=-1, keepdims=True)
    t_exp = jnp.exp(t_logits - t_max)
    t_den = jnp.sum(t_exp, axis=-1, keepdims=True)

    # --- student branch: log_softmax(l / student_temp, axis=-1) -------------
    s_logits = l * (1.0 / STUDENT_TEMP)
    s_max = jnp.max(s_logits, axis=-1, keepdims=True)
    s_shift = s_logits - s_max
    s_lse = jnp.log(jnp.sum(jnp.exp(s_shift), axis=-1, keepdims=True))
    s_logsm = s_shift - s_lse

    # --- folded cross entropy: sum(t_exp * (-log p_s)) / sum(t_exp) ---------
    row_ce = jnp.sum(t_exp * (-s_logsm), axis=-1, keepdims=True)
    loss_ref[...] = row_ce * pl.reciprocal(t_den, approx=False)

    # --- per-tile partial column sum for the center EMA ---------------------
    bsum_ref[...] = jnp.sum(u, axis=0, keepdims=True)


def _pick_tile_b(batch, feat_dim, itemsize):
    """Pick a batch tile: ~4 MiB per input block, multiple of 8 rows."""
    target_bytes = 4 << 20
    rows = max(8, target_bytes // max(1, feat_dim * itemsize))
    rows = max(8, min(int(rows) // 8 * 8, 1024))
    b_pad8 = -(-batch // 8) * 8
    return min(rows, b_pad8)


def make_teacher_temp_schedule(warmup_teacher_temp, teacher_temp,
                               warmup_teacher_temp_epochs, nepochs):
    warm = jnp.linspace(warmup_teacher_temp, teacher_temp,
                        warmup_teacher_temp_epochs)
    rest = jnp.ones(nepochs - warmup_teacher_temp_epochs) * teacher_temp
    return jnp.concatenate([warm, rest]).astype(jnp.float32)


def centering_loss(labelled_output, unlabelled_output, center,
                   teacher_temp_schedule, epoch, *, tile_b=None,
                   vmem_limit_bytes=None):
    """Functional equivalent of CenteringLoss.forward + update_center.

    Returns (loss[B] f32, new_center[1, D] f32).
    """
    B, D = labelled_output.shape
    assert unlabelled_output.shape == (B, D)
    assert center.shape == (1, D)

    if tile_b is None:
        tile_b = _pick_tile_b(B, D, jnp.dtype(labelled_output.dtype).itemsize)
    assert tile_b % 8 == 0, "TILE_B must be a multiple of 8 (f32 sublane)"

    num_tiles = pl.cdiv(B, tile_b)
    b_pad = num_tiles * tile_b
    if b_pad != B:
        # Zero-padded rows: losses are sliced off, zeros don't affect column sums.
        pad = ((0, b_pad - B), (0, 0))
        labelled_output = jnp.pad(labelled_output, pad)
        unlabelled_output = jnp.pad(unlabelled_output, pad)

    # Hoist the teacher-temperature divide to a single scalar (SMEM).
    inv_temp = (1.0 / teacher_temp_schedule[epoch]).reshape(1).astype(jnp.float32)

    if vmem_limit_bytes is None:
        # 2 inputs x 2 pipeline buffers + f32 working set + center/outputs + margin.
        in_tile = tile_b * D * jnp.dtype(labelled_output.dtype).itemsize
        est = 4 * in_tile + 6 * tile_b * D * 4 + 4 * D * 4 + (2 << 20)
        # Cap at 48 MiB so the same config is safe on v7x (64 MiB physical VMEM);
        # on v5e/v6e (128 MiB) this can be raised toward ~96 MiB with bigger tiles.
        vmem_limit_bytes = int(min(max(est, 32 << 20), 48 << 20))

    loss_padded, partial_sums = pl.pallas_call(
        _centering_loss_kernel,
        grid=(num_tiles,),
        out_shape=(
            jax.ShapeDtypeStruct((b_pad, 1), jnp.float32),
            jax.ShapeDtypeStruct((num_tiles, 1, D), jnp.float32),
        ),
        in_specs=[
            pl.BlockSpec(memory_space=pltpu.MemorySpace.SMEM),   # 1/teacher_temp
            pl.BlockSpec((tile_b, D), lambda i: (i, 0)),         # labelled (student)
            pl.BlockSpec((tile_b, D), lambda i: (i, 0)),         # unlabelled (teacher)
            pl.BlockSpec((1, D), lambda i: (0, 0)),              # center (VMEM-resident)
        ],
        out_specs=(
            pl.BlockSpec((tile_b, 1), lambda i: (i, 0)),         # per-row loss
            pl.BlockSpec((None, 1, D), lambda i: (i, 0, 0)),     # per-tile column sums
        ),
        compiler_params=pltpu.CompilerParams(
            dimension_semantics=("parallel",),
            vmem_limit_bytes=vmem_limit_bytes,
        ),
    )(inv_temp, labelled_output, unlabelled_output, center)

    loss = loss_padded[:B, 0]

    # Tiny cross-tile reduction + center EMA in XLA ((num_tiles, D) -> (1, D)).
    batch_center = jnp.sum(partial_sums[:, 0, :], axis=0, keepdims=True) / B
    new_center = (center.astype(jnp.float32) * CENTER_MOMENTUM
                  + batch_center * (1.0 - CENTER_MOMENTUM))
    return loss, new_center


def _reference(labelled, unlabelled, center, sched, epoch):
    labelled = labelled.astype(jnp.float32)
    unlabelled = unlabelled.astype(jnp.float32)
    center = center.astype(jnp.float32)
    temp = sched[epoch]
    s = labelled / STUDENT_TEMP
    t = jax.nn.softmax((unlabelled - center) / temp, axis=-1)
    loss = jnp.sum(-t * jax.nn.log_softmax(s, axis=-1), axis=-1)
    new_center = (center * CENTER_MOMENTUM
                  + (jnp.sum(unlabelled, axis=0, keepdims=True) / labelled.shape[0])
                  * (1.0 - CENTER_MOMENTUM))
    return loss, new_center


if __name__ == "__main__":
    sched = make_teacher_temp_schedule(
        warmup_teacher_temp=0.04, teacher_temp=0.07,
        warmup_teacher_temp_epochs=5, nepochs=10)

    key = jax.random.PRNGKey(0)
    k1, k2, k3, k4 = jax.random.split(key, 4)

    # --- case 1: single-tile grid, f32 inputs (original toy config) ---------
    out_dim, batch, epoch = 128, 8, 3
    labelled = jax.random.normal(k1, (batch, out_dim), dtype=jnp.float32)
    unlabelled = jax.random.normal(k2, (batch, out_dim), dtype=jnp.float32)
    center = jnp.zeros((1, out_dim), dtype=jnp.float32)  # buffer init: zeros

    loss, new_center = centering_loss(labelled, unlabelled, center, sched, epoch)
    jax.block_until_ready((loss, new_center))
    ref_loss, ref_center = _reference(labelled, unlabelled, center, sched, epoch)
    assert jnp.allclose(loss, ref_loss, rtol=1e-4, atol=1e-4)
    assert jnp.allclose(new_center, ref_center, rtol=1e-5, atol=1e-5)

    # --- case 2: multi-tile grid, bf16 inputs, ragged batch (padding path) --
    out_dim2, batch2, epoch2 = 256, 20, 7
    labelled2 = jax.random.normal(k3, (batch2, out_dim2),
                                  dtype=jnp.float32).astype(jnp.bfloat16)
    unlabelled2 = jax.random.normal(k4, (batch2, out_dim2),
                                    dtype=jnp.float32).astype(jnp.bfloat16)
    center2 = jnp.zeros((1, out_dim2), dtype=jnp.float32)

    loss2, new_center2 = centering_loss(labelled2, unlabelled2, center2, sched,
                                        epoch2, tile_b=8)
    jax.block_until_ready((loss2, new_center2))
    ref_loss2, ref_center2 = _reference(labelled2, unlabelled2, center2, sched, epoch2)
    assert jnp.allclose(loss2, ref_loss2, rtol=1e-4, atol=1e-4)
    assert jnp.allclose(new_center2, ref_center2, rtol=1e-5, atol=1e-5)

    print("KERNEL_OK")
</pallas_src>

<mosaic_0001>
module attributes {stable_mosaic.version = 11 : i64} {
  func.func @_centering_loss_kernel(%arg0: i32, %arg1: memref<1xf32, #tpu.memory_space<smem>>, %arg2: memref<8x128xf32, #tpu.memory_space<vmem>>, %arg3: memref<8x128xf32, #tpu.memory_space<vmem>>, %arg4: memref<1x128xf32, #tpu.memory_space<vmem>>, %arg5: memref<8x1xf32, #tpu.memory_space<vmem>>, %arg6: memref<1x1x128xf32, #tpu.memory_space<vmem>>) attributes {dimension_semantics = [#tpu.dimension_semantics<parallel>], iteration_bounds = array<i64: 1>, scalar_prefetch = 0 : i64, scratch_operands = 0 : i64, tpu.core_type = #tpu.core_type<tc>, window_params = [{transform_indices = @transform_0, window_bounds = array<i64: 1>}, {transform_indices = @transform_1, window_bounds = array<i64: 8, 128>}, {transform_indices = @transform_2, window_bounds = array<i64: 8, 128>}, {pipeline_mode = #tpu.pipeline_mode<synchronous>, transform_indices = @transform_3, window_bounds = array<i64: 1, 128>}, {transform_indices = @transform_4, window_bounds = array<i64: 8, 1>}, {transform_indices = @transform_5, window_bounds = array<i64: 1, 1, 128>}]} {
    %c0 = arith.constant 0 : index
    %0 = memref.load %arg1[%c0] : memref<1xf32, #tpu.memory_space<smem>>
    %c0_0 = arith.constant 0 : index
    %c0_1 = arith.constant 0 : index
    %1 = vector.load %arg3[%c0_0, %c0_1] : memref<8x128xf32, #tpu.memory_space<vmem>>, vector<8x128xf32>
    %c0_2 = arith.constant 0 : index
    %c0_3 = arith.constant 0 : index
    %2 = vector.load %arg2[%c0_2, %c0_3] : memref<8x128xf32, #tpu.memory_space<vmem>>, vector<8x128xf32>
    %c0_4 = arith.constant 0 : index
    %c0_5 = arith.constant 0 : index
    %3 = vector.load %arg4[%c0_4, %c0_5] : memref<1x128xf32, #tpu.memory_space<vmem>>, vector<1x128xf32>
    %4 = vector.broadcast %3 : vector<1x128xf32> to vector<8x128xf32>
    %5 = arith.subf %1, %4 : vector<8x128xf32>
    %6 = vector.broadcast %0 : f32 to vector<8x128xf32>
    %7 = arith.mulf %5, %6 : vector<8x128xf32>
    %cst = arith.constant dense<0xFF800000> : vector<8xf32>
    %8 = vector.multi_reduction <maximumf>, %7, %cst [1] : vector<8x128xf32> to vector<8xf32>
    %9 = vector.shape_cast %8 : vector<8xf32> to vector<8x1xf32>
    %10 = vector.broadcast %9 : vector<8x1xf32> to vector<8x128xf32>
    %11 = arith.subf %7, %10 : vector<8x128xf32>
    %12 = math.exp %11 : vector<8x128xf32>
    %cst_6 = arith.constant dense<0.000000e+00> : vector<8xf32>
    %13 = vector.multi_reduction <add>, %12, %cst_6 [1] : vector<8x128xf32> to vector<8xf32>
    %14 = vector.shape_cast %13 : vector<8xf32> to vector<8x1xf32>
    %cst_7 = arith.constant 1.000000e+01 : f32
    %15 = vector.broadcast %cst_7 : f32 to vector<8x128xf32>
    %16 = arith.mulf %2, %15 : vector<8x128xf32>
    %cst_8 = arith.constant dense<0xFF800000> : vector<8xf32>
    %17 = vector.multi_reduction <maximumf>, %16, %cst_8 [1] : vector<8x128xf32> to vector<8xf32>
    %18 = vector.shape_cast %17 : vector<8xf32> to vector<8x1xf32>
    %19 = vector.broadcast %18 : vector<8x1xf32> to vector<8x128xf32>
    %20 = arith.subf %16, %19 : vector<8x128xf32>
    %21 = math.exp %20 : vector<8x128xf32>
    %cst_9 = arith.constant dense<0.000000e+00> : vector<8xf32>
    %22 = vector.multi_reduction <add>, %21, %cst_9 [1] : vector<8x128xf32> to vector<8xf32>
    %23 = vector.shape_cast %22 : vector<8xf32> to vector<8x1xf32>
    %24 = math.log %23 : vector<8x1xf32>
    %25 = vector.broadcast %24 : vector<8x1xf32> to vector<8x128xf32>
    %26 = arith.subf %20, %25 : vector<8x128xf32>
    %cst_10 = arith.constant 0.000000e+00 : f32
    %27 = vector.broadcast %cst_10 : f32 to vector<8x128xf32>
    %28 = arith.subf %27, %26 : vector<8x128xf32>
    %29 = arith.mulf %12, %28 : vector<8x128xf32>
    %cst_11 = arith.constant dense<0.000000e+00> : vector<8xf32>
    %30 = vector.multi_reduction <add>, %29, %cst_11 [1] : vector<8x128xf32> to vector<8xf32>
    %31 = vector.shape_cast %30 : vector<8xf32> to vector<8x1xf32>
    %32 = tpu.reciprocal %14 : vector<8x1xf32> -> vector<8x1xf32>
    %33 = arith.mulf %31, %32 : vector<8x1xf32>
    %c0_12 = arith.constant 0 : index
    %c0_13 = arith.constant 0 : index
    %34 = vector.load %arg5[%c0_12, %c0_13] : memref<8x1xf32, #tpu.memory_space<vmem>>, vector<8x1xf32>
    tpu.vector_store %arg5[%c0_12, %c0_13], %33 {strides = array<i32>} : memref<8x1xf32, #tpu.memory_space<vmem>>, vector<8x1xf32>,
    %cst_14 = arith.constant dense<0.000000e+00> : vector<128xf32>
    %35 = vector.multi_reduction <add>, %1, %cst_14 [0] : vector<8x128xf32> to vector<128xf32>
    %36 = vector.shape_cast %35 : vector<128xf32> to vector<1x128xf32>
    %c0_15 = arith.constant 0 : index
    %c0_16 = arith.constant 0 : index
    %c0_17 = arith.constant 0 : index
    %37 = vector.load %arg6[%c0_15, %c0_16, %c0_17] : memref<1x1x128xf32, #tpu.memory_space<vmem>>, vector<1x1x128xf32>
    %38 = vector.shape_cast %37 : vector<1x1x128xf32> to vector<1x128xf32>
    %39 = vector.shape_cast %36 : vector<1x128xf32> to vector<1x1x128xf32>
    tpu.vector_store %arg6[%c0_15, %c0_16, %c0_17], %39 {strides = array<i32>} : memref<1x1x128xf32, #tpu.memory_space<vmem>>, vector<1x1x128xf32>,
    return
  }
  func.func @transform_0(%arg0: i32) -> i32 {
    %c0_i32 = arith.constant 0 : i32
    %c0_i32_0 = arith.constant 0 : i32
    return %c0_i32 : i32
  }
  func.func @transform_1(%arg0: i32) -> (i32, i32) {
    %c0_i32 = arith.constant 0 : i32
    %c0_i32_0 = arith.constant 0 : i32
    return %arg0, %c0_i32 : i32, i32
  }
  func.func @transform_2(%arg0: i32) -> (i32, i32) {
    %c0_i32 = arith.constant 0 : i32
    %c0_i32_0 = arith.constant 0 : i32
    return %arg0, %c0_i32 : i32, i32
  }
  func.func @transform_3(%arg0: i32) -> (i32, i32) {
    %c0_i32 = arith.constant 0 : i32
    %c0_i32_0 = arith.constant 0 : i32
    %c0_i32_1 = arith.constant 0 : i32
    return %c0_i32, %c0_i32_0 : i32, i32
  }
  func.func @transform_4(%arg0: i32) -> (i32, i32) {
    %c0_i32 = arith.constant 0 : i32
    %c0_i32_0 = arith.constant 0 : i32
    return %arg0, %c0_i32 : i32, i32
  }
  func.func @transform_5(%arg0: i32) -> (i32, i32, i32) {
    %c0_i32 = arith.constant 0 : i32
    %c0_i32_0 = arith.constant 0 : i32
    %c0_i32_1 = arith.constant 0 : i32
    return %arg0, %c0_i32, %c0_i32_0 : i32, i32, i32
  }
}

</mosaic_0001>

<llo_original>
// kernel: tpu_custom_call.1
$region0: #{tpu_custom_call.1}
  #allocation0 [shape = 'u32[]', space=smem, size = 0x4, offset = 0x4, fixed_abs, tag = 'smem constant byte address 0x4 - core index']
  #allocation1 [shape = 'u32[72,128]{1,0:T(1,128)}', space=vmem, size = 0x9000, scoped, tag = 'internal scratch']
  #allocation2 [shape = 'f32[1]{0:T(128)S(6)}', space=smem, size = 0x200, scoped, tag = 'scoped memory for tpu_custom_call.1']
  %s0 = inlined_call_operand.<no memory space> [shape: f32[1], index: 0, kind: input, shape index: {}]
  %s1 = inlined_call_operand.hbm [shape: f32[8,128], index: 1, kind: input, shape index: {}]
  %s2 = inlined_call_operand.hbm [shape: f32[8,128], index: 2, kind: input, shape index: {}]
  %s3 = inlined_call_operand.vmem [shape: f32[1,128], index: 3, kind: input, shape index: {}]
  %s4 = inlined_call_operand.vmem [shape: f32[8,1], index: 4, kind: output, shape index: {0}]
  %s5 = inlined_call_operand.hbm [shape: f32[1,1,128], index: 5, kind: output, shape index: {1}]
  %6 = xla_tuple %s4, %s5
  %s7 = sld [smem:[#allocation0]]
  $region42: #{tpu_custom_call.1} parent=0
    _
  %s9 = ssub.s32 1, %s7
  %s10 = scalar_select 0, %s9, %s7
  %11 = sst [smem:[#allocation2]] %s0
  $region1: #{tpu_custom_call.1} parent=0
    #allocation3 [shape = 'u8[4096]{0}', space=vmem, size = 0x1000, scoped, tag = 'input window, operand 1, single buffered']
    #allocation4 [shape = 's32[1]{0}', space=sflag, size = 0x4, scoped, tag = 'scoped memory for tpu_custom_call.1']
    #allocation5 [shape = 's32[1]{0}', space=sflag, size = 0x4, scoped, tag = 'scoped memory for tpu_custom_call.1']
    #allocation6 [shape = 'u8[4096]{0}', space=vmem, size = 0x1000, scoped, tag = 'input window, operand 2, single buffered']
    #allocation7 [shape = 's32[1]{0}', space=sflag, size = 0x4, scoped, tag = 'scoped memory for tpu_custom_call.1']
    #allocation8 [shape = 'u8[512]{0}', space=vmem, size = 0x400, scoped, tag = 'output window, operand 1, single buffered']
    %12 = vsyncpa [#allocation4], 0
    %13 = vsyncpa [#allocation7], 0
    %14 = vsyncpa [#allocation5], 0
    // Predicated region
    $region2: #{tpu_custom_call.1} parent=1 // pred_check
      _
    $region3: #{tpu_custom_call.1} parent=1 // pred_check_branch
      %16 = sbr.rel (0) target = $region5
    $region4: #{tpu_custom_call.1} parent=1 // pred_region
      _
    $region5: #{tpu_custom_call.1} parent=1 // pred_fallthru
      _
    // Predicated region
    $region6: #{tpu_custom_call.1} parent=1 // pred_check
      _
    $region7: #{tpu_custom_call.1} parent=1 // pred_check_branch
      %18 = sbr.rel (0) target = $region9
    $region8: #{tpu_custom_call.1} parent=1 // pred_region
      %20 = vsyncadd [#allocation4], 0
      %s22 = sshll.u32 %s1, 4
      %s23 = int_to_ptr.hbm [resolvable:$true] %s22
      %s24 = sshll.u32 [#allocation3], 4
      %s25 = int_to_ptr.vmem [resolvable:$true] %s24
      %27 = dma.hbm_to_vmem [thread:$0]  %s23, 128, %s25, [#allocation4]
    $region9: #{tpu_custom_call.1} parent=1 // pred_fallthru
      _
    // Predicated region
    $region10: #{tpu_custom_call.1} parent=1 // pred_check
      _
    $region11: #{tpu_custom_call.1} parent=1 // pred_check_branch
      %29 = sbr.rel (0) target = $region13
    $region12: #{tpu_custom_call.1} parent=1 // pred_region
      %31 = vsyncadd [#allocation7], 0
      %s33 = sshll.u32 %s2, 4
      %s34 = int_to_ptr.hbm [resolvable:$true] %s33
      %s35 = sshll.u32 [#allocation6], 4
      %s36 = int_to_ptr.vmem [resolvable:$true] %s35
      %38 = dma.hbm_to_vmem [thread:$0]  %s34, 128, %s36, [#allocation7]
    $region13: #{tpu_custom_call.1} parent=1 // pred_fallthru
      _
    // Predicated region
    $region14: #{tpu_custom_call.1} parent=1 // pred_check
      _
    $region15: #{tpu_custom_call.1} parent=1 // pred_check_branch
      %40 = sbr.rel (0) target = $region17
    $region16: #{tpu_custom_call.1} parent=1 // pred_region
      _
    $region17: #{tpu_custom_call.1} parent=1 // pred_fallthru
      _
    // Predicated region
    $region18: #{tpu_custom_call.1} parent=1 // pred_check
      _
    $region19: #{tpu_custom_call.1} parent=1 // pred_check_branch
      %42 = sbr.rel (0) target = $region21
    $region20: #{tpu_custom_call.1} parent=1 // pred_region
      %44 = dma.done [#allocation4], 128
    $region21: #{tpu_custom_call.1} parent=1 // pred_fallthru
      _
    // Predicated region
    $region22: #{tpu_custom_call.1} parent=1 // pred_check
      _
    $region23: #{tpu_custom_call.1} parent=1 // pred_check_branch
      %46 = sbr.rel (0) target = $region25
    $region24: #{tpu_custom_call.1} parent=1 // pred_region
      %48 = dma.done [#allocation7], 128
    $region25: #{tpu_custom_call.1} parent=1 // pred_fallthru
      _
    %s49 = sld [smem:[#allocation2]]
    %v50 = vld [vmem:[#allocation6] sm:$0xff]
    %v51 = vld [vmem:[#allocation3] sm:$0xff]
    %v52 = vld [vmem:[%s3] sm:$0x1]
    %v54 = vperm.slane %v52, 0
    %v56 = vsub.f32 %v50, %v54
    %v57 = vstv %s49
    %v58 = vmul.f32 %v56, %v57
    %59 = vmax.xlane.f32.xlu0 %v58
    %v60 = vpop.xlane.xlu0 %59
    %v61 = vsub.f32 %v58, %v60
    %v62 = vmul.f32 %v61, 1.442695
    %v63 = vpow.pop %v62
    %64 = vadd.xlane.f32.xlu0 %v63
    %v65 = vpop.xlane.xlu0 %64
    %v66 = vmul.f32 %v51, 10.0
    %67 = vmax.xlane.f32.xlu0 %v66
    %v68 = vpop.xlane.xlu0 %67
    %v69 = vsub.f32 %v66, %v68
    %v70 = vmul.f32 %v69, 1.442695
    %v71 = vpow.pop %v70
    %72 = vadd.xlane.f32.xlu0 %v71
    %v73 = vpop.xlane.xlu0 %72
    %v74 = vlog2.pop %v73
    %v75 = vmul.f32 %v74, 0.6931472
    %v76 = vsub.f32 %v69, %v75
    %v77 = vsub.f32 0.0, %v76
    %v78 = vmul.f32 %v63, %v77
    %79 = vadd.xlane.f32.xlu0 %v78
    %v80 = vpop.xlane.xlu0 %79
    %v81 = vrcp.pop %v65
    %v82 = vmul.f32 %v65, %v81
    %v83 = vsub.f32 1.0, %v82
    %v84 = vmul.f32 %v81, %v83
    %v85 = vadd.f32 %v81, %v84
    %vm86 = vweird.f32 %v65
    %vm87 = vweird.f32 %v81
    %vm88 = vmor %vm86, %vm87
    %v89 = vsel %vm88, %v81, %v85
    %v90 = vand.u32 2147483647, %v65
    %vm91 = vcmp.eq.f32.partialorder %v90, 8.507059e+37
    %v92 = vand.u32 %v65, 2147483648
    %v93 = vor.u32 1.1754944e-38, %v92
    %v94 = vsel %vm91, %v93, %v89
    %v95 = vmul.f32 %v80, %v94
    %vm96 = vcmask 7168
    %97 = vst.msk [vmem:[%s4] sm:$0xff] %vm96, %v95
    %v98 = vrot.slane %v50, 4
    %v99 = vadd.f32 %v50, %v98
    %v100 = vrot.slane %v99, 2
    %v101 = vadd.f32 %v99, %v100
    %v102 = vrot.slane %v101, 1
    %v103 = vadd.f32 %v101, %v102
    %104 = vst [vmem:[#allocation8] sm:$0x1] %v103
    // Predicated region
    $region26: #{tpu_custom_call.1} parent=1 // pred_check
      _
    $region27: #{tpu_custom_call.1} parent=1 // pred_check_branch
      %106 = sbr.rel (0) target = $region29
    $region28: #{tpu_custom_call.1} parent=1 // pred_region
      _
    $region29: #{tpu_custom_call.1} parent=1 // pred_fallthru
      _
    // Predicated region
    $region30: #{tpu_custom_call.1} parent=1 // pred_check
      _
    $region31: #{tpu_custom_call.1} parent=1 // pred_check_branch
      %108 = sbr.rel (0) target = $region33
    $region32: #{tpu_custom_call.1} parent=1 // pred_region
      %110 = vsyncadd [#allocation5], 0
      %s112 = sshll.u32 [#allocation8], 4
      %s113 = int_to_ptr.vmem [resolvable:$true] %s112
      %s114 = sshll.u32 %s5, 4
      %s115 = int_to_ptr.hbm [resolvable:$true] %s114
      %117 = dma.vmem_to_hbm [thread:$0]  %s113, 16, %s115, [#allocation5]
    $region33: #{tpu_custom_call.1} parent=1 // pred_fallthru
      _
    // Predicated region
    $region34: #{tpu_custom_call.1} parent=1 // pred_check
      _
    $region35: #{tpu_custom_call.1} parent=1 // pred_check_branch
      %119 = sbr.rel (0) target = $region37
    $region36: #{tpu_custom_call.1} parent=1 // pred_region
      _
    $region37: #{tpu_custom_call.1} parent=1 // pred_fallthru
      _
    // Predicated region
    $region38: #{tpu_custom_call.1} parent=1 // pred_check
      _
    $region39: #{tpu_custom_call.1} parent=1 // pred_check_branch
      %121 = sbr.rel (0) target = $region41
    $region40: #{tpu_custom_call.1} parent=1 // pred_region
      %123 = dma.done [#allocation5], 16
    $region41: #{tpu_custom_call.1} parent=1 // pred_fallthru
      _
    %124 = vsyncpa [#allocation4], 1
    %125 = vsyncpa [#allocation7], 1
    %126 = vsyncpa [#allocation5], 1

</llo_original>
